<compile_context>
chip_gen: v5e
topology: v5e:2x2
jax: 0.10.0
libtpu: 0.0.40
codegen_flags: <defaults>
</compile_context>

<pallas_src>
import numpy as np
import jax
import jax.numpy as jnp
from jax import lax
from jax.experimental import pallas as pl
from jax.experimental.pallas import tpu as pltpu


def _ner_kernel(seg_ref, x_ref, we_ref, be_ref, wc_ref, bc_ref, out_ref):
    """One batch tile per grid step: encoder proj -> word pooling -> classifier."""
    TB, S, H = x_ref.shape
    Tp = wc_ref.shape[1]

    # --- encoder stub: tanh(x @ W_enc + b_enc) -------------------------------
    # bf16 MXU operands, f32 accumulation; tanh kept in f32 (no bf16 EUP on v5e).
    x2 = x_ref[...].reshape(TB * S, H)                            # bf16 (TB*S, H)
    enc2 = jnp.tanh(
        jnp.dot(x2, we_ref[...], preferred_element_type=jnp.float32)
        + be_ref[...])                                            # f32 (TB*S, H)
    enc = enc2.astype(jnp.bfloat16).reshape(TB, S, H)

    # --- wordpiece -> word segment-sum pooling --------------------------------
    # seg_ref[b, s] = 1-based word id of token s (0 = token belongs to no word),
    # precomputed with a cumsum in the wrapper.  One compare builds the exact
    # 0/1 selection tensor; the pooling itself is a batched MXU matmul.
    seg = seg_ref[...]                                            # (TB, S) int32
    w_ids = lax.broadcasted_iota(jnp.int32, (1, S, S), 1)         # word slot on axis 1
    sel = (seg[:, None, :] == (w_ids + 1)).astype(jnp.bfloat16)   # (TB, S, S)
    word = jnp.einsum('bws,bsh->bwh', sel, enc,
                      preferred_element_type=jnp.float32)         # f32 (TB, S, H)

    # --- classifier (tag dim zero-padded to a lane-dense multiple of 128) -----
    logits2 = (jnp.dot(word.reshape(TB * S, H).astype(jnp.bfloat16), wc_ref[...],
                       preferred_element_type=jnp.float32)
               + bc_ref[...])                                     # f32 (TB*S, Tp)
    out_ref[...] = logits2.reshape(TB, S, Tp)


@jax.jit
def ner_tagger_forward(src_seq, src_index, emb_table, w_enc, b_enc, w_cls, b_cls):
    """src_seq, src_index: (seq, batch) int32, mirroring the PyTorch call.

    Returns (logits, counts):
      logits : (batch, seq, tags) f32 — word slot w of row b is valid iff w < counts[b]
               (invalid slots equal the classifier bias).
      counts : (batch,) int32 number of words per sentence.
    The variable-length torch.cat is left to the caller (dynamic output shape).
    """
    seq_bs = jnp.transpose(src_seq)                    # (B, S)
    idx_bs = jnp.transpose(src_index)                  # (B, S)
    B, S = seq_bs.shape
    H = emb_table.shape[1]
    T = w_cls.shape[1]
    Tp = ((T + 127) // 128) * 128                      # lane-dense padded tag dim

    # Embedding lookup (data-dependent row gather) stays in XLA; bf16 halves
    # the HBM->VMEM traffic of the biggest kernel input.
    # TODO(synk): could move in-kernel via scalar-prefetched ids + manual DMA
    # from an HBM-resident table to avoid the (B,S,H) HBM round trip entirely.
    x_emb = emb_table[seq_bs].astype(jnp.bfloat16)     # (B, S, H)

    # Tiny segmentation metadata (O(B*S) int32), computed once in XLA:
    # 1-based word id for member tokens (idx==2 starts a word, idx==3 continues),
    # 0 for tokens belonging to no word.  Replaces the per-step tri/iota build
    # and the M=1 prefix-count MXU matmul of the previous revision.
    is_start = idx_bs == 2
    member = is_start | (idx_bs == 3)
    seg_id = jnp.where(member, jnp.cumsum(is_start.astype(jnp.int32), axis=1), 0)

    w_enc_b = w_enc.astype(jnp.bfloat16)
    w_cls_p = jnp.pad(w_cls, ((0, 0), (0, Tp - T))).astype(jnp.bfloat16)
    b_cls_p = jnp.pad(b_cls, ((0, 0), (0, Tp - T)))    # f32 (added post-accumulation)

    # Batch tiling: whole batch per step when small, 8-row tiles otherwise.
    tb = B if (B <= 8 or B % 8 != 0) else 8
    grid = (B // tb,)

    grid_spec = pltpu.PrefetchScalarGridSpec(
        num_scalar_prefetch=0,
        grid=grid,
        in_specs=[
            pl.BlockSpec((tb, S), lambda g: (g, 0)),           # segment ids (per tile)
            pl.BlockSpec((tb, S, H), lambda g: (g, 0, 0)),     # token embeddings
            pl.BlockSpec((H, H), lambda g: (0, 0)),            # W_enc (constant)
            pl.BlockSpec((1, H), lambda g: (0, 0)),            # b_enc
            pl.BlockSpec((H, Tp), lambda g: (0, 0)),           # W_cls (padded)
            pl.BlockSpec((1, Tp), lambda g: (0, 0)),           # b_cls (padded)
        ],
        out_specs=pl.BlockSpec((tb, S, Tp), lambda g: (g, 0, 0)),
    )

    logits_padded = pl.pallas_call(
        _ner_kernel,
        out_shape=jax.ShapeDtypeStruct((B, S, Tp), jnp.float32),
        grid_spec=grid_spec,
        compiler_params=pltpu.CompilerParams(
            dimension_semantics=("parallel",),                 # independent batch tiles
            vmem_limit_bytes=32 * 1024 * 1024),                # explicit headroom (v7x)
    )(seg_id, x_emb, w_enc_b, b_enc, w_cls_p, b_cls_p)

    logits = logits_padded[:, :, :T]                           # strip lane padding
    counts = jnp.sum(is_start, axis=1).astype(jnp.int32)       # words per sentence
    return logits, counts


def reference_forward(src_seq, src_index, emb_table, w_enc, b_enc, w_cls, b_cls):
    """Pure-numpy mirror of the torch loop semantics (f32)."""
    seq_bs = np.asarray(src_seq).T
    idx_bs = np.asarray(src_index).T
    enc = np.tanh(np.asarray(emb_table)[seq_bs] @ np.asarray(w_enc)
                  + np.asarray(b_enc))
    hidden_states = []
    for indexes, enc_batch in zip(idx_bs, enc):
        tmp_sent = []
        tmp_output = None
        for idx, enc_output in zip(indexes, enc_batch):
            if idx == 2:
                if tmp_output is not None:
                    tmp_sent.append(tmp_output)
                    tmp_output = None
                tmp_output = enc_output
            elif idx == 3:
                tmp_output = tmp_output + enc_output
        if tmp_output is not None:
            tmp_sent.append(tmp_output)
        hidden_states.append(np.stack(tmp_sent, axis=0))
    hs = np.concatenate(hidden_states, axis=0)
    return hs @ np.asarray(w_cls) + np.asarray(b_cls)


if __name__ == "__main__":
    B, S, H, T, V = 2, 16, 32, 8, 50

    key = jax.random.PRNGKey(0)
    k1, k2, k3, k4, k5, k6 = jax.random.split(key, 6)
    emb_table = jax.random.normal(k1, (V, H), dtype=jnp.float32) * 0.1
    w_enc = jax.random.normal(k2, (H, H), dtype=jnp.float32) * 0.1
    b_enc = jax.random.normal(k3, (1, H), dtype=jnp.float32) * 0.1
    w_cls = jax.random.normal(k4, (H, T), dtype=jnp.float32) * 0.1
    b_cls = jax.random.normal(k5, (1, T), dtype=jnp.float32) * 0.1

    # token ids (seq, batch)
    src_seq = jax.random.randint(k6, (S, B), minval=4, maxval=V, dtype=jnp.int32)
    # well-formed wordpiece index stream (seq-major), like the torch input:
    #   1 = special token, 2 = word start, 3 = word continuation, 0 = pad
    idx_b0 = [1, 2, 3, 2, 3, 3, 2, 2, 3, 2, 1, 0, 0, 0, 0, 0]
    idx_b1 = [1, 2, 2, 3, 2, 3, 3, 3, 2, 2, 3, 2, 1, 0, 0, 0]
    src_index = jnp.asarray(np.stack([idx_b0, idx_b1], axis=1), dtype=jnp.int32)  # (S, B)

    logits, counts = ner_tagger_forward(src_seq, src_index, emb_table,
                                        w_enc, b_enc, w_cls, b_cls)
    logits = jax.block_until_ready(logits)

    # Caller-side compaction of the padded per-sentence word slots (the torch
    # module's variable-length torch.cat); this is outside the kernel path.
    counts_np = np.asarray(counts)
    lp = np.asarray(logits)
    out = np.concatenate([lp[i, : int(counts_np[i])] for i in range(B)], axis=0)

    ref = reference_forward(src_seq, src_index, emb_table,
                            w_enc, b_enc, w_cls, b_cls)

    assert out.shape == ref.shape, (out.shape, ref.shape)
    # tolerance loosened vs. the pure-f32 revision: matmuls now use bf16
    # MXU operands (f32 accumulation) per the performance review.
    assert np.allclose(out, ref, rtol=2e-2, atol=2e-2), \
        f"max abs diff {np.max(np.abs(out - ref))}"
    print("KERNEL_OK")
</pallas_src>

<mosaic_0001>
module attributes {stable_mosaic.version = 11 : i64} {
  func.func @_ner_kernel(%arg0: i32, %arg1: memref<2x16xi32, #tpu.memory_space<vmem>>, %arg2: memref<2x16x32xbf16, #tpu.memory_space<vmem>>, %arg3: memref<32x32xbf16, #tpu.memory_space<vmem>>, %arg4: memref<1x32xf32, #tpu.memory_space<vmem>>, %arg5: memref<32x128xbf16, #tpu.memory_space<vmem>>, %arg6: memref<1x128xf32, #tpu.memory_space<vmem>>, %arg7: memref<2x16x128xf32, #tpu.memory_space<vmem>>) attributes {dimension_semantics = [#tpu.dimension_semantics<parallel>], iteration_bounds = array<i64: 1>, scalar_prefetch = 0 : i64, scratch_operands = 0 : i64, tpu.core_type = #tpu.core_type<tc>, window_params = [{transform_indices = @transform_0, window_bounds = array<i64: 2, 16>}, {transform_indices = @transform_1, window_bounds = array<i64: 2, 16, 32>}, {pipeline_mode = #tpu.pipeline_mode<synchronous>, transform_indices = @transform_2, window_bounds = array<i64: 32, 32>}, {pipeline_mode = #tpu.pipeline_mode<synchronous>, transform_indices = @transform_3, window_bounds = array<i64: 1, 32>}, {pipeline_mode = #tpu.pipeline_mode<synchronous>, transform_indices = @transform_4, window_bounds = array<i64: 32, 128>}, {pipeline_mode = #tpu.pipeline_mode<synchronous>, transform_indices = @transform_5, window_bounds = array<i64: 1, 128>}, {transform_indices = @transform_6, window_bounds = array<i64: 2, 16, 128>}]} {
    %c0 = arith.constant 0 : index
    %c0_0 = arith.constant 0 : index
    %c0_1 = arith.constant 0 : index
    %0 = vector.load %arg2[%c0, %c0_0, %c0_1] : memref<2x16x32xbf16, #tpu.memory_space<vmem>>, vector<2x16x32xbf16>
    %1 = vector.shape_cast %0 : vector<2x16x32xbf16> to vector<32x32xbf16>
    %c0_2 = arith.constant 0 : index
    %c0_3 = arith.constant 0 : index
    %2 = vector.load %arg3[%c0_2, %c0_3] : memref<32x32xbf16, #tpu.memory_space<vmem>>, vector<32x32xbf16>
    %cst = arith.constant dense<0.000000e+00> : vector<32x32xf32>
    %3 = tpu.matmul %1, %2, %cst {dimension_numbers = #tpu.dot_dimension_numbers<[1], [0], [0], [1], [0, 0, 1, 1], [], []>} : vector<32x32xbf16>, vector<32x32xbf16>, vector<32x32xf32> -> vector<32x32xf32>
    %c0_4 = arith.constant 0 : index
    %c0_5 = arith.constant 0 : index
    %4 = vector.load %arg4[%c0_4, %c0_5] : memref<1x32xf32, #tpu.memory_space<vmem>>, vector<1x32xf32>
    %5 = vector.broadcast %4 : vector<1x32xf32> to vector<32x32xf32>
    %6 = arith.addf %3, %5 : vector<32x32xf32>
    %7 = math.tanh %6 : vector<32x32xf32>
    %8 = arith.truncf %7 : vector<32x32xf32> to vector<32x32xbf16>
    %9 = vector.shape_cast %8 : vector<32x32xbf16> to vector<2x16x32xbf16>
    %c0_6 = arith.constant 0 : index
    %c0_7 = arith.constant 0 : index
    %10 = vector.load %arg1[%c0_6, %c0_7] : memref<2x16xi32, #tpu.memory_space<vmem>>, vector<2x16xi32>
    %11 = tpu.iota {dimensions = array<i32: 1>} : vector<1x16x16xi32>
    %12 = vector.shape_cast %10 : vector<2x16xi32> to vector<2x1x16xi32>
    %c1_i32 = arith.constant 1 : i32
    %13 = vector.broadcast %c1_i32 : i32 to vector<1x16x16xi32>
    %14 = arith.addi %11, %13 : vector<1x16x16xi32>
    %15 = vector.broadcast %12 : vector<2x1x16xi32> to vector<2x16x16xi32>
    %16 = vector.broadcast %14 : vector<1x16x16xi32> to vector<2x16x16xi32>
    %17 = arith.cmpi eq, %15, %16 : vector<2x16x16xi32>
    %18 = arith.extui %17 : vector<2x16x16xi1> to vector<2x16x16xi32>
    %19 = arith.sitofp %18 : vector<2x16x16xi32> to vector<2x16x16xf32>
    %20 = arith.truncf %19 : vector<2x16x16xf32> to vector<2x16x16xbf16>
    "tpu.trace_start"() <{level = 10 : i32, message = "bws,bsh->bwh"}> : () -> ()
    %cst_8 = arith.constant dense<0.000000e+00> : vector<2x16x32xf32>
    %21 = tpu.matmul %20, %9, %cst_8 {dimension_numbers = #tpu.dot_dimension_numbers<[2], [1], [1], [2], [0, 0, 0, 1, 1, 2], [0], [0]>} : vector<2x16x16xbf16>, vector<2x16x32xbf16>, vector<2x16x32xf32> -> vector<2x16x32xf32>
    "tpu.trace_stop"() : () -> ()
    %22 = vector.shape_cast %21 : vector<2x16x32xf32> to vector<32x32xf32>
    %23 = arith.truncf %22 : vector<32x32xf32> to vector<32x32xbf16>
    %c0_9 = arith.constant 0 : index
    %c0_10 = arith.constant 0 : index
    %24 = vector.load %arg5[%c0_9, %c0_10] : memref<32x128xbf16, #tpu.memory_space<vmem>>, vector<32x128xbf16>
    %cst_11 = arith.constant dense<0.000000e+00> : vector<32x128xf32>
    %25 = tpu.matmul %23, %24, %cst_11 {dimension_numbers = #tpu.dot_dimension_numbers<[1], [0], [0], [1], [0, 0, 1, 1], [], []>} : vector<32x32xbf16>, vector<32x128xbf16>, vector<32x128xf32> -> vector<32x128xf32>
    %c0_12 = arith.constant 0 : index
    %c0_13 = arith.constant 0 : index
    %26 = vector.load %arg6[%c0_12, %c0_13] : memref<1x128xf32, #tpu.memory_space<vmem>>, vector<1x128xf32>
    %27 = vector.broadcast %26 : vector<1x128xf32> to vector<32x128xf32>
    %28 = arith.addf %25, %27 : vector<32x128xf32>
    %29 = vector.shape_cast %28 : vector<32x128xf32> to vector<2x16x128xf32>
    %c0_14 = arith.constant 0 : index
    %c0_15 = arith.constant 0 : index
    %c0_16 = arith.constant 0 : index
    %30 = vector.load %arg7[%c0_14, %c0_15, %c0_16] : memref<2x16x128xf32, #tpu.memory_space<vmem>>, vector<2x16x128xf32>
    tpu.vector_store %arg7[%c0_14, %c0_15, %c0_16], %29 {strides = array<i32>} : memref<2x16x128xf32, #tpu.memory_space<vmem>>, vector<2x16x128xf32>,
    return
  }
  func.func @transform_0(%arg0: i32) -> (i32, i32) {
    %c0_i32 = arith.constant 0 : i32
    %c0_i32_0 = arith.constant 0 : i32
    return %arg0, %c0_i32 : i32, i32
  }
  func.func @transform_1(%arg0: i32) -> (i32, i32, i32) {
    %c0_i32 = arith.constant 0 : i32
    %c0_i32_0 = arith.constant 0 : i32
    %c0_i32_1 = arith.constant 0 : i32
    return %arg0, %c0_i32, %c0_i32_0 : i32, i32, i32
  }
  func.func @transform_2(%arg0: i32) -> (i32, i32) {
    %c0_i32 = arith.constant 0 : i32
    %c0_i32_0 = arith.constant 0 : i32
    %c0_i32_1 = arith.constant 0 : i32
    return %c0_i32, %c0_i32_0 : i32, i32
  }
  func.func @transform_3(%arg0: i32) -> (i32, i32) {
    %c0_i32 = arith.constant 0 : i32
    %c0_i32_0 = arith.constant 0 : i32
    %c0_i32_1 = arith.constant 0 : i32
    return %c0_i32, %c0_i32_0 : i32, i32
  }
  func.func @transform_4(%arg0: i32) -> (i32, i32) {
    %c0_i32 = arith.constant 0 : i32
    %c0_i32_0 = arith.constant 0 : i32
    %c0_i32_1 = arith.constant 0 : i32
    return %c0_i32, %c0_i32_0 : i32, i32
  }
  func.func @transform_5(%arg0: i32) -> (i32, i32) {
    %c0_i32 = arith.constant 0 : i32
    %c0_i32_0 = arith.constant 0 : i32
    %c0_i32_1 = arith.constant 0 : i32
    return %c0_i32, %c0_i32_0 : i32, i32
  }
  func.func @transform_6(%arg0: i32) -> (i32, i32, i32) {
    %c0_i32 = arith.constant 0 : i32
    %c0_i32_0 = arith.constant 0 : i32
    %c0_i32_1 = arith.constant 0 : i32
    return %arg0, %c0_i32, %c0_i32_0 : i32, i32, i32
  }
}

</mosaic_0001>

<llo_original>
// kernel: ner_tagger_forward.1
$region0: #{ner_tagger_forward.1}
  #allocation0 [shape = 'u32[]', space=smem, size = 0x4, offset = 0x4, fixed_abs, tag = 'smem constant byte address 0x4 - core index']
  #allocation1 [shape = 'u32[72,128]{1,0:T(1,128)}', space=vmem, size = 0x9000, scoped, tag = 'internal scratch']
  %s0 = inlined_call_operand.vmem [shape: s32[2,16], index: 0, kind: input, shape index: {}]
  %s1 = inlined_call_operand.vmem [shape: bf16[2,16,32], index: 1, kind: input, shape index: {}]
  %s2 = inlined_call_operand.vmem [shape: bf16[32,32], index: 2, kind: input, shape index: {}]
  %s3 = inlined_call_operand.vmem [shape: f32[1,32], index: 3, kind: input, shape index: {}]
  %s4 = inlined_call_operand.vmem [shape: bf16[32,128], index: 4, kind: input, shape index: {}]
  %s5 = inlined_call_operand.vmem [shape: f32[1,128], index: 5, kind: input, shape index: {}]
  %s6 = inlined_call_operand.vmem [shape: f32[2,16,128], index: 6, kind: output, shape index: {}]
  %s7 = sld [smem:[#allocation0]]
  $region34: #{ner_tagger_forward.1} parent=0
    _
  %s9 = ssub.s32 1, %s7
  %s10 = scalar_select 0, %s9, %s7
  // Predicated region
  $region2: #{ner_tagger_forward.1} parent=0 // pred_check
    _
  $region3: #{ner_tagger_forward.1} parent=0 // pred_check_branch
    %12 = sbr.rel (0) target = $region5
  $region4: #{ner_tagger_forward.1} parent=0 // pred_region
    _
  $region5: #{ner_tagger_forward.1} parent=0 // pred_fallthru
    _
  // Predicated region
  $region6: #{ner_tagger_forward.1} parent=0 // pred_check
    _
  $region7: #{ner_tagger_forward.1} parent=0 // pred_check_branch
    %14 = sbr.rel (0) target = $region9
  $region8: #{ner_tagger_forward.1} parent=0 // pred_region
    _
  $region9: #{ner_tagger_forward.1} parent=0 // pred_fallthru
    _
  // Predicated region
  $region10: #{ner_tagger_forward.1} parent=0 // pred_check
    _
  $region11: #{ner_tagger_forward.1} parent=0 // pred_check_branch
    %16 = sbr.rel (0) target = $region13
  $region12: #{ner_tagger_forward.1} parent=0 // pred_region
    _
  $region13: #{ner_tagger_forward.1} parent=0 // pred_fallthru
    _
  // Predicated region
  $region14: #{ner_tagger_forward.1} parent=0 // pred_check
    _
  $region15: #{ner_tagger_forward.1} parent=0 // pred_check_branch
    %18 = sbr.rel (0) target = $region17
  $region16: #{ner_tagger_forward.1} parent=0 // pred_region
    _
  $region17: #{ner_tagger_forward.1} parent=0 // pred_fallthru
    _
  // Predicated region
  $region18: #{ner_tagger_forward.1} parent=0 // pred_check
    _
  $region19: #{ner_tagger_forward.1} parent=0 // pred_check_branch
    %20 = sbr.rel (0) target = $region21
  $region20: #{ner_tagger_forward.1} parent=0 // pred_region
    _
  $region21: #{ner_tagger_forward.1} parent=0 // pred_fallthru
    _
  // Predicated region
  $region22: #{ner_tagger_forward.1} parent=0 // pred_check
    _
  $region23: #{ner_tagger_forward.1} parent=0 // pred_check_branch
    %22 = sbr.rel (0) target = $region25
  $region24: #{ner_tagger_forward.1} parent=0 // pred_region
    _
  $region25: #{ner_tagger_forward.1} parent=0 // pred_fallthru
    _
  %v24 = vld [vmem:[%s1] sm:$0xf]
  %v25 = vld [vmem:[%s1 + $0x4] sm:$0xf]
  %v26 = vld [vmem:[%s1 + $0x8] sm:$0xf]
  %v27 = vld [vmem:[%s1 + $0xc] sm:$0xf]
  %v28 = vld [vmem:[%s2] sm:$0xf]
  %v29 = vld [vmem:[%s2 + $0x4] sm:$0xf]
  %v30 = vld [vmem:[%s2 + $0x8] sm:$0xf]
  %v31 = vld [vmem:[%s2 + $0xc] sm:$0xf]
  %v32 = vld [vmem:[%s3] sm:$0x1]
  %v34 = vperm.slane %v32, 0
  %v40 = vunpack.c.l.b16 %v24
  %v41 = vunpack.c.l.b16 %v25
  %v42 = vunpack.c.l.b16 %v26
  %v43 = vunpack.c.l.b16 %v27
  %v44 = vpack.c.b16 %v41, %v40
  %v45 = vpack.c.b16 %v43, %v42
  %v50 = vunpack.c.l.b16 %v28
  %v51 = vunpack.c.l.b16 %v29
  %v52 = vunpack.c.l.b16 %v30
  %v53 = vunpack.c.l.b16 %v31
  %v54 = vpack.c.b16 %v51, %v50
  %v55 = vpack.c.b16 %v53, %v52
  %vm58 = vcmask 261120
  %v60 = vsel %vm58, %v44, 0
  %v63 = vsel %vm58, %v45, 0
  %65 = vmatpush.bf16.msra.mxu0 0
  %66 = vmatpush.bf16.msra.mxu0 0
  %67 = vmatpush.bf16.msra.mxu0 0
  %68 = vmatpush.bf16.msra.mxu0 0
  %69 = vmatpush.bf16.msra.mxu0 0
  %70 = vmatpush.bf16.msra.mxu0 0
  %71 = vmatpush.bf16.msra.mxu0 %v55
  %72 = vmatpush.bf16.msra.mxu0 %v54
  %73 = vmatmul.bf16.gmra.mxu0 %v60
  %v74 = vpop.f32.mrf.mxu0
  %v75 = vadd.f32 %v34, %v74
  %v76 = vpop.f32.mrf.mxu0
  %v77 = vadd.f32 %v34, %v76
  %78 = vmatmul.bf16.gmra.mxu0 %v63
  %v79 = vpop.f32.mrf.mxu0
  %v80 = vadd.f32 %v34, %v79
  %v81 = vpop.f32.mrf.mxu0
  %v82 = vadd.f32 %v34, %v81
  %83 = vdwg.mxu0
  %v84 = vtanh.pop %v75
  %v85 = vtanh.pop %v77
  %v86 = vtanh.pop %v80
  %v87 = vtanh.pop %v82
  %v88 = vpack.c.bf16 %v84, %v84
  %v89 = vpack.c.bf16 %v85, %v85
  %v90 = vpack.c.bf16 %v86, %v86
  %v91 = vpack.c.bf16 %v87, %v87
  %v92 = vld [vmem:[%s0] sm:$0x3]
  %v93 = vlaneseq
  %v94 = vshrl.u32 %v93, 7
  %v95 = vadd.s32 %v94, 8
  %v96 = vrot.slane %v92, 1
  %v97 = vadd.s32 %v94, 1
  %v98 = vadd.s32 %v95, 1
  %v99 = vperm.slane %v92, 0
  %v100 = vperm.slane %v96, 0
  %vm101 = vcmp.eq.s32.totalorder %v99, %v97
  %vm102 = vcmp.eq.s32.totalorder %v99, %v98
  %vm103 = vcmp.eq.s32.totalorder %v100, %v97
  %vm104 = vcmp.eq.s32.totalorder %v100, %v98
  %v105 = vsel %vm101, 1, 0
  %v106 = vsel %vm102, 1, 0
  %v107 = vsel %vm103, 1, 0
  %v108 = vsel %vm104, 1, 0
  %v109 = vcvt.s32.f32 %v105
  %v110 = vcvt.s32.f32 %v106
  %v111 = vcvt.s32.f32 %v107
  %v112 = vcvt.s32.f32 %v108
  %v113 = vpack.c.bf16 %v109, %v109
  %v114 = vpack.c.bf16 %v110, %v110
  %v115 = vpack.c.bf16 %v111, %v111
  %v116 = vpack.c.bf16 %v112, %v112
  %v119 = vunpack.c.l.b16 %v113
  %v120 = vunpack.c.l.b16 %v114
  %v121 = vpack.c.b16 %v120, %v119
  %v124 = vunpack.c.l.b16 %v88
  %v125 = vunpack.c.l.b16 %v89
  %v126 = vpack.c.b16 %v125, %v124
  %vm128 = vcmask 130048
  %v130 = vsel %vm128, %v121, 0
  %132 = vmatpush.bf16.msra.mxu0 0
  %133 = vmatpush.bf16.msra.mxu0 0
  %134 = vmatpush.bf16.msra.mxu0 0
  %135 = vmatpush.bf16.msra.mxu0 0
  %136 = vmatpush.bf16.msra.mxu0 0
  %137 = vmatpush.bf16.msra.mxu0 0
  %138 = vmatpush.bf16.msra.mxu0 0
  %139 = vmatpush.bf16.msra.mxu0 %v126
  %140 = vmatmul.bf16.gmra.mxu0 %v130
  %v141 = vpop.f32.mrf.mxu0
  %v142 = vadd.f32 0.0, %v141
  %v143 = vpop.f32.mrf.mxu0
  %v144 = vadd.f32 0.0, %v143
  %145 = vdwg.mxu0
  %v148 = vunpack.c.l.b16 %v115
  %v149 = vunpack.c.l.b16 %v116
  %v150 = vpack.c.b16 %v149, %v148
  %v153 = vunpack.c.l.b16 %v90
  %v154 = vunpack.c.l.b16 %v91
  %v155 = vpack.c.b16 %v154, %v153
  %v158 = vsel %vm128, %v150, 0
  %160 = vmatpush.bf16.msra.mxu0 0
  %161 = vmatpush.bf16.msra.mxu0 0
  %162 = vmatpush.bf16.msra.mxu0 0
  %163 = vmatpush.bf16.msra.mxu0 0
  %164 = vmatpush.bf16.msra.mxu0 0
  %165 = vmatpush.bf16.msra.mxu0 0
  %166 = vmatpush.bf16.msra.mxu0 0
  %167 = vmatpush.bf16.msra.mxu0 %v155
  %168 = vmatmul.bf16.gmra.mxu0 %v158
  %v169 = vpop.f32.mrf.mxu0
  %v170 = vadd.f32 0.0, %v169
  %v171 = vpop.f32.mrf.mxu0
  %v172 = vadd.f32 0.0, %v171
  %173 = vdwg.mxu0
  %v174 = vpack.c.bf16 %v144, %v142
  %v175 = vpack.c.bf16 %v172, %v170
  %v176 = vld [vmem:[%s4] sm:$0xf]
  %v177 = vld [vmem:[%s4 + $0x4] sm:$0xf]
  %v178 = vld [vmem:[%s4 + $0x8] sm:$0xf]
  %v179 = vld [vmem:[%s4 + $0xc] sm:$0xf]
  %v180 = vld [vmem:[%s5] sm:$0x1]
  %v182 = vperm.slane %v180, 0
  %v188 = vunpack.c.l.b16 %v176
  %v189 = vunpack.c.l.b16 %v177
  %v190 = vunpack.c.l.b16 %v178
  %v191 = vunpack.c.l.b16 %v179
  %v192 = vpack.c.b16 %v189, %v188
  %v193 = vpack.c.b16 %v191, %v190
  %v197 = vsel %vm58, %v174, 0
  %v200 = vsel %vm58, %v175, 0
  %202 = vmatpush.bf16.msra.mxu0 0
  %203 = vmatpush.bf16.msra.mxu0 0
  %204 = vmatpush.bf16.msra.mxu0 0
  %205 = vmatpush.bf16.msra.mxu0 0
  %206 = vmatpush.bf16.msra.mxu0 0
  %207 = vmatpush.bf16.msra.mxu0 0
  %208 = vmatpush.bf16.msra.mxu0 %v193
  %209 = vmatpush.bf16.msra.mxu0 %v192
  %210 = vmatmul.bf16.gmra.mxu0 %v197
  %v211 = vpop.f32.mrf.mxu0
  %v212 = vadd.f32 %v182, %v211
  %v213 = vpop.f32.mrf.mxu0
  %v214 = vadd.f32 %v182, %v213
  %215 = vmatmul.bf16.gmra.mxu0 %v200
  %v216 = vpop.f32.mrf.mxu0
  %v217 = vadd.f32 %v182, %v216
  %v218 = vpop.f32.mrf.mxu0
  %v219 = vadd.f32 %v182, %v218
  %220 = vdwg.mxu0
  %221 = vst [vmem:[%s6] sm:$0xff] %v212
  %222 = vst [vmem:[%s6 + $0x8] sm:$0xff] %v214
  %223 = vst [vmem:[%s6 + $0x10] sm:$0xff] %v217
  %224 = vst [vmem:[%s6 + $0x18] sm:$0xff] %v219
  // Predicated region
  $region26: #{ner_tagger_forward.1} parent=0 // pred_check
    _
  $region27: #{ner_tagger_forward.1} parent=0 // pred_check_branch
    %226 = sbr.rel (0) target = $region29
  $region28: #{ner_tagger_forward.1} parent=0 // pred_region
    _
  $region29: #{ner_tagger_forward.1} parent=0 // pred_fallthru
    _
  // Predicated region
  $region30: #{ner_tagger_forward.1} parent=0 // pred_check
    _
  $region31: #{ner_tagger_forward.1} parent=0 // pred_check_branch
    %228 = sbr.rel (0) target = $region33
  $region32: #{ner_tagger_forward.1} parent=0 // pred_region
    _
  $region33: #{ner_tagger_forward.1} parent=0 // pred_fallthru
    _

</llo_original>
